<compile_context>
chip_gen: v7x
topology: tpu7x:2x2x1
jax: 0.10.0
libtpu: 0.0.40
codegen_flags: <defaults>
</compile_context>

<pallas_src>
import jax
import jax.numpy as jnp
from jax.experimental import pallas as pl
from jax.experimental.pallas import tpu as pltpu


def _relu_conv_bn_kernel(p_ref, w_ref, o_ref):
    """One grid step = one lane-dense slab of output columns.

    p_ref: (KKC_pad, COLS) bf16  ReLU'd im2col patches; row KKC is all-ones
                                 (carries the folded BN shift), rows above it
                                 are zero padding to the bf16 sublane granule.
    w_ref: (Cout, KKC_pad) bf16  conv weights with BN scale folded in; column
                                 KKC holds the BN shift, remaining padding 0.
    o_ref: (Cout, COLS)    f32   output columns in (N, Ho, Wo) order on lanes.
    """
    # Single MXU matmul with fp32 accumulation; conv + BN (scale & shift) are
    # all folded into the operands, so there is nothing else to do.
    o_ref[...] = jnp.dot(w_ref[...], p_ref[...],
                         preferred_element_type=jnp.float32).astype(o_ref.dtype)


def relu_conv_bn(x_nchw, weight, gamma, beta, running_mean, running_var,
                 *, stride, padding, eps=1e-5):
    """x_nchw: (N, Cin, H, W); weight: (Cout, Cin, K, K) (PyTorch layouts)."""
    N, Cin, H, W = x_nchw.shape
    Cout, _, K, _ = weight.shape
    Ho = (H + 2 * padding - K) // stride + 1
    Wo = (W + 2 * padding - K) // stride + 1
    KKC = K * K * Cin
    HW = Ho * Wo
    total_cols = N * HW
    # Pad the contraction dim to the bf16 sublane packing granule (16), leaving
    # room for the ones/shift row that folds the BN shift into the matmul.
    KKC_pad = ((KKC + 1 + 15) // 16) * 16

    # ---- XLA-side glue: ReLU once, bf16 im2col, NCHW column order. ---------
    # ReLU commutes exactly with the bf16 cast and with the zero-padded im2col
    # gather (relu(0)=0), so applying it here matches ReLU -> conv semantics.
    xb = jnp.maximum(x_nchw, 0.0).astype(jnp.bfloat16)
    x_pad = jnp.pad(xb, ((0, 0), (0, 0), (padding, padding), (padding, padding)))
    taps = []
    for kh in range(K):
        for kw in range(K):
            taps.append(
                x_pad[:, :, kh:kh + (Ho - 1) * stride + 1:stride,
                            kw:kw + (Wo - 1) * stride + 1:stride])  # (N,Cin,Ho,Wo)
    patches = jnp.stack(taps, axis=0)                   # (K*K, N, Cin, Ho, Wo)
    patches = jnp.transpose(patches, (0, 2, 1, 3, 4))   # (K*K, Cin, N, Ho, Wo)
    patches = patches.reshape(KKC, total_cols)
    # Row KKC = ones (pairs with the shift column); zero-pad up to KKC_pad.
    patches = jnp.concatenate(
        [patches,
         jnp.ones((1, total_cols), jnp.bfloat16),
         jnp.zeros((KKC_pad - KKC - 1, total_cols), jnp.bfloat16)], axis=0)

    # ---- Eval-mode BatchNorm folded into the weight matrix. ----------------
    inv_std = 1.0 / jnp.sqrt(running_var.astype(jnp.float32) + eps)
    scale = gamma.astype(jnp.float32) * inv_std                        # (Cout,)
    shift = (beta.astype(jnp.float32)
             - running_mean.astype(jnp.float32) * scale)               # (Cout,)

    # (Cout, Cin, K, K) -> (Cout, K, K, Cin) -> (Cout, KKC); fold BN scale,
    # append the shift as column KKC (matches the ones row of the patches).
    w = jnp.transpose(weight.astype(jnp.float32), (0, 2, 3, 1)).reshape(Cout, KKC)
    w = w * scale[:, None]
    w_full = jnp.zeros((Cout, KKC_pad), jnp.float32)
    w_full = w_full.at[:, :KKC].set(w)
    w_full = w_full.at[:, KKC].set(shift)
    w_full = w_full.astype(jnp.bfloat16)

    # ---- Grid: few, wide, lane-dense column slabs. -------------------------
    # Prefer >= 2 steps (so both v7x TensorCores get work) with slabs that are
    # multiples of 128 lanes and capped at 2048 lanes per step; fall back to a
    # single full-extent block for awkward sizes.
    if total_cols % 256 == 0:
        cols = min(2048, total_cols // 2)
        while total_cols % cols != 0:
            cols -= 128
    else:
        cols = total_cols
    num_steps = total_cols // cols
    # NOTE: current VMEM footprint (< 100 KB double-buffered) is far below the
    # scoped default on all generations; re-derive vs v7x's 64 MiB if scaled up.

    cost = pl.CostEstimate(
        flops=2 * Cout * KKC_pad * total_cols,
        transcendentals=0,
        bytes_accessed=(patches.size * 2 + w_full.size * 2
                        + Cout * total_cols * 4))

    out = pl.pallas_call(
        _relu_conv_bn_kernel,
        out_shape=jax.ShapeDtypeStruct((Cout, total_cols), jnp.float32),
        grid_spec=pltpu.PrefetchScalarGridSpec(
            num_scalar_prefetch=0,
            grid=(num_steps,),
            in_specs=[
                # Lane-dense slab of patch columns for this step.
                pl.BlockSpec((KKC_pad, cols), lambda s: (0, s)),
                # Constant block index -> fetched once, kept resident.
                pl.BlockSpec((Cout, KKC_pad), lambda s: (0, 0)),
            ],
            out_specs=pl.BlockSpec((Cout, cols), lambda s: (0, s)),
        ),
        compiler_params=pltpu.CompilerParams(
            # On v7x the even step count lets this "parallel" axis shard across
            # both TensorCores; pltpu.CORE_PARALLEL / pl.core_map is the
            # explicit alternative when targeting v7x exclusively.
            dimension_semantics=("parallel",)),
        cost_estimate=cost,
    )(patches, w_full)

    # (Cout, N*HW) -> (N, Cout, Ho, Wo): tiny XLA transpose in the wrapper.
    return jnp.transpose(out.reshape(Cout, N, Ho, Wo), (1, 0, 2, 3))


def _reference(x_nchw, weight, gamma, beta, running_mean, running_var,
               *, stride, padding, eps=1e-5):
    """Pure-JAX fp32 reference (ReLU -> conv -> eval-mode BN)."""
    xr = jnp.maximum(x_nchw, 0.0)
    conv = jax.lax.conv_general_dilated(
        xr, weight,
        window_strides=(stride, stride),
        padding=[(padding, padding), (padding, padding)],
        dimension_numbers=("NCHW", "OIHW", "NCHW"))
    inv_std = 1.0 / jnp.sqrt(running_var + eps)
    scale = (gamma * inv_std)[None, :, None, None]
    shift = (beta - running_mean * gamma * inv_std)[None, :, None, None]
    return conv * scale + shift


if __name__ == "__main__":
    # Module config: ReLUConvBN(C_in=4, C_out=8, kernel_size=3, stride=1, padding=1)
    N, C_in, H, W = 2, 4, 16, 16
    C_out, K, stride, padding = 8, 3, 1, 1

    key = jax.random.PRNGKey(0)
    kx, kw = jax.random.split(key)
    x = jax.random.normal(kx, (N, C_in, H, W), dtype=jnp.float32)
    weight = jax.random.normal(kw, (C_out, C_in, K, K), dtype=jnp.float32) * 0.1

    # Deterministic BatchNorm parameters (affine=True) + running stats.
    gamma = jnp.linspace(0.5, 1.5, C_out, dtype=jnp.float32)
    beta = jnp.linspace(-0.2, 0.2, C_out, dtype=jnp.float32)
    running_mean = jnp.linspace(-0.1, 0.1, C_out, dtype=jnp.float32)
    running_var = jnp.linspace(0.8, 1.2, C_out, dtype=jnp.float32)

    out = relu_conv_bn(x, weight, gamma, beta, running_mean, running_var,
                       stride=stride, padding=padding)
    out = jax.block_until_ready(out)

    ref = _reference(x, weight, gamma, beta, running_mean, running_var,
                     stride=stride, padding=padding)
    assert out.shape == (N, C_out, H, W), out.shape
    # bf16 MXU operands (incl. bf16-rounded folded shift) with fp32 accumulation
    # -> ~1e-2-level tolerance vs the fp32 reference.
    assert jnp.allclose(out, ref, atol=5e-2, rtol=5e-2), "mismatch vs reference"

    print("KERNEL_OK")
</pallas_src>

<mosaic_0001>
module attributes {stable_mosaic.version = 11 : i64} {
  func.func @_relu_conv_bn_kernel(%arg0: i32, %arg1: memref<48x256xbf16, #tpu.memory_space<vmem>>, %arg2: memref<8x48xbf16, #tpu.memory_space<vmem>>, %arg3: memref<8x256xf32, #tpu.memory_space<vmem>>) attributes {dimension_semantics = [#tpu.dimension_semantics<parallel>], iteration_bounds = array<i64: 2>, scalar_prefetch = 0 : i64, scratch_operands = 0 : i64, tpu.core_type = #tpu.core_type<tc>, window_params = [{transform_indices = @transform_0, window_bounds = array<i64: 48, 256>}, {pipeline_mode = #tpu.pipeline_mode<synchronous>, transform_indices = @transform_1, window_bounds = array<i64: 8, 48>}, {transform_indices = @transform_2, window_bounds = array<i64: 8, 256>}]} {
    %c0 = arith.constant 0 : index
    %c0_0 = arith.constant 0 : index
    %0 = vector.load %arg2[%c0, %c0_0] : memref<8x48xbf16, #tpu.memory_space<vmem>>, vector<8x48xbf16>
    %c0_1 = arith.constant 0 : index
    %c0_2 = arith.constant 0 : index
    %1 = vector.load %arg1[%c0_1, %c0_2] : memref<48x256xbf16, #tpu.memory_space<vmem>>, vector<48x256xbf16>
    %cst = arith.constant dense<0.000000e+00> : vector<8x256xf32>
    %2 = tpu.matmul %0, %1, %cst {dimension_numbers = #tpu.dot_dimension_numbers<[1], [0], [0], [1], [0, 0, 1, 1], [], []>} : vector<8x48xbf16>, vector<48x256xbf16>, vector<8x256xf32> -> vector<8x256xf32>
    %c0_3 = arith.constant 0 : index
    %c0_4 = arith.constant 0 : index
    %3 = vector.load %arg3[%c0_3, %c0_4] : memref<8x256xf32, #tpu.memory_space<vmem>>, vector<8x256xf32>
    tpu.vector_store %arg3[%c0_3, %c0_4], %2 {strides = array<i32>} : memref<8x256xf32, #tpu.memory_space<vmem>>, vector<8x256xf32>,
    return
  }
  func.func @transform_0(%arg0: i32) -> (i32, i32) {
    %c0_i32 = arith.constant 0 : i32
    %c0_i32_0 = arith.constant 0 : i32
    return %c0_i32, %arg0 : i32, i32
  }
  func.func @transform_1(%arg0: i32) -> (i32, i32) {
    %c0_i32 = arith.constant 0 : i32
    %c0_i32_0 = arith.constant 0 : i32
    %c0_i32_1 = arith.constant 0 : i32
    return %c0_i32, %c0_i32_0 : i32, i32
  }
  func.func @transform_2(%arg0: i32) -> (i32, i32) {
    %c0_i32 = arith.constant 0 : i32
    %c0_i32_0 = arith.constant 0 : i32
    return %c0_i32, %arg0 : i32, i32
  }
}

</mosaic_0001>

<llo_original>
// kernel: tpu_custom_call.1
$region0: #{tpu_custom_call.1}
  #allocation0 [shape = 'u32[]', space=smem, size = 0x4, offset = 0x4, fixed_abs, tag = 'smem constant byte address 0x4 - core index']
  #allocation1 [shape = 'u32[144,128]{1,0:T(1,128)}', space=vmem, size = 0x12000, scoped, tag = 'internal scratch']
  %s0 = inlined_call_operand.hbm [shape: bf16[48,512], index: 0, kind: input, shape index: {}]
  %s1 = inlined_call_operand.hbm [shape: bf16[8,48], index: 1, kind: input, shape index: {}]
  %s2 = inlined_call_operand.hbm [shape: f32[8,512], index: 2, kind: output, shape index: {}]
  %s3 = sld [smem:[#allocation0]]
  $region49: #{tpu_custom_call.1} parent=0
    _
  %s5 = ssub.s32 1, %s3
  %s6 = scalar_select 0, %s5, %s3
  $region1: #{tpu_custom_call.1} parent=0
    #allocation2 [shape = 'u8[49152]{0}', space=vmem, size = 0xc000, scoped, tag = 'input window, operand 0']
    #allocation3 [shape = 's32[2]{0}', space=sflag, size = 0x8, scoped, tag = 'scoped memory for tpu_custom_call.1']
    #allocation4 [shape = 's32[2]{0}', space=sflag, size = 0x8, scoped, tag = 'scoped memory for tpu_custom_call.1']
    #allocation5 [shape = 'u8[2048]{0}', space=vmem, size = 0x800, scoped, tag = 'input window, operand 1, single buffered']
    #allocation6 [shape = 's32[1]{0}', space=sflag, size = 0x4, scoped, tag = 'scoped memory for tpu_custom_call.1']
    #allocation7 [shape = 'u8[16384]{0}', space=vmem, size = 0x4000, scoped, tag = 'output window, operand 0']
    %7 = vsyncpa [#allocation3], 0
    %s8 = scalar_lea.sflag [#allocation3], 1
    %9 = vsyncpa %s8, 0
    %10 = vsyncpa [#allocation6], 0
    %11 = vsyncpa [#allocation4], 0
    %s12 = scalar_lea.sflag [#allocation4], 1
    %13 = vsyncpa %s12, 0
    loop: start=0, step=1, limit=4
    $region2: #{tpu_custom_call.1} parent=1 // loop_pre_header
      _
    $region3: #{tpu_custom_call.1} parent=1 // loop_header
      %s15 = sphi 0, %s19
      %p16 = scmp.ge.s32.totalorder %s15, 4
      %s25 = sphi 0, %s27
      %s28 = sphi 0, %s25
      %s29 = sphi 0, %s28
      %s45 = sphi 0, %s29
      %s49 = sphi 0, %s49
      %s51 = sphi 0, %s49
      %s52 = sphi 0, %s51
      %s66 = sphi 0, %s52
      %s72 = sphi 0, %s74
      %s75 = sphi 0, %s72
      %s76 = sphi 0, %s75
      %s92 = sphi 0, %s76
    $region4: #{tpu_custom_call.1} parent=1 // loop_header_branch
      %18 = sbr.rel (%p16) target = $region8
    $region5: #{tpu_custom_call.1} parent=1 // loop_body
      %s20 = ssub.s32 %s15, 1
      %s21 = ssub.s32 %s15, 2
      %s22 = sadd.s32 %s15, 1
      %s23 = ssub.s32 %s15, %s22
      %p24 = scmp.eq.s32.totalorder %s23, 0
      %s26 = sadd.s32 %s25, 1
      %s27 = scalar_select %p24, %s25, %s26
      %p30 = pneg %p24
      %p31 = scmp.eq.s32.totalorder %s15, 1
      %p32 = por %p30, %p31
      %p33 = scmp.ne.s32.totalorder %s25, %s28
      %p34 = scmp.eq.s32.totalorder %s15, 0
      %p35 = por %p33, %p34
      %p36 = scmp.ne.s32.totalorder %s25, %s28
      %p37 = scmp.eq.s32.totalorder %s20, 1
      %p38 = por %p36, %p37
      %p39 = scmp.ne.s32.totalorder %s28, %s29
      %p40 = scmp.eq.s32.totalorder %s20, 0
      %p41 = por %p39, %p40
      %p42 = scmp.ne.s32.totalorder %s28, %s29
      %p43 = scmp.eq.s32.totalorder %s21, 1
      %p44 = por %p42, %p43
      %p46 = scmp.ne.s32.totalorder %s29, %s45
      %p47 = scmp.eq.s32.totalorder %s21, 0
      %p48 = por %p46, %p47
      %s50 = sadd.s32 %s49, 1
      %p53 = scmp.eq.s32.totalorder %s15, 1
      %p54 = scmp.ne.s32.totalorder %s49, %s51
      %p55 = scmp.eq.s32.totalorder %s15, 0
      %p56 = por %p54, %p55
      %p57 = scmp.ne.s32.totalorder %s49, %s51
      %p58 = scmp.eq.s32.totalorder %s20, 1
      %p59 = por %p57, %p58
      %p60 = scmp.ne.s32.totalorder %s51, %s52
      %p61 = scmp.eq.s32.totalorder %s20, 0
      %p62 = por %p60, %p61
      %p63 = scmp.ne.s32.totalorder %s51, %s52
      %p64 = scmp.eq.s32.totalorder %s21, 1
      %p65 = por %p63, %p64
      %p67 = scmp.ne.s32.totalorder %s52, %s66
      %p68 = scmp.eq.s32.totalorder %s21, 0
      %p69 = por %p67, %p68
      %s70 = ssub.s32 %s15, %s22
      %p71 = scmp.eq.s32.totalorder %s70, 0
      %s73 = sadd.s32 %s72, 1
      %s74 = scalar_select %p71, %s72, %s73
      %p77 = pneg %p71
      %p78 = scmp.eq.s32.totalorder %s15, 1
      %p79 = por %p77, %p78
      %p80 = scmp.ne.s32.totalorder %s72, %s75
      %p81 = scmp.eq.s32.totalorder %s15, 0
      %p82 = por %p80, %p81
      %p83 = scmp.ne.s32.totalorder %s72, %s75
      %p84 = scmp.eq.s32.totalorder %s20, 1
      %p85 = por %p83, %p84
      %p86 = scmp.ne.s32.totalorder %s75, %s76
      %p87 = scmp.eq.s32.totalorder %s20, 0
      %p88 = por %p86, %p87
      %p89 = scmp.ne.s32.totalorder %s75, %s76
      %p90 = scmp.eq.s32.totalorder %s21, 1
      %p91 = por %p89, %p90
      %p93 = scmp.ne.s32.totalorder %s76, %s92
      %p94 = scmp.eq.s32.totalorder %s21, 0
      %p95 = por %p93, %p94
      %p96 = scmp.le.s32.totalorder 1, %s15
      %p97 = scmp.lt.s32.totalorder %s15, 3
      %p98 = pnand %p96, %p97
      %p99 = pneg %p98
      // Predicated region
      $region9: #{tpu_custom_call.1} parent=5 // pred_check
        _
      $region10: #{tpu_custom_call.1} parent=5 // pred_check_branch
        %101 = sbr.rel (%p98) target = $region12
      $region11: #{tpu_custom_call.1} parent=5 // pred_region
        %s102 = ssub.s32 %s15, 1
        // Predicated region
        $region13: #{tpu_custom_call.1} parent=11 // pred_check
          %p103 = pneg %p62
        $region14: #{tpu_custom_call.1} parent=11 // pred_check_branch
          %105 = sbr.rel (%p103) target = $region16
        $region15: #{tpu_custom_call.1} parent=11 // pred_region
          %s107 = ssub.s32 64, 64
          %108 = vsyncadd [#allocation6], %s107
          %s110 = sshll.u32 [#allocation5], 4
          %s111 = int_to_ptr.vmem [resolvable:$true] %s110
          %113 = dma.hbm_to_vmem [thread:$0]  %s1, 64, %s111, [#allocation6]
        $region16: #{tpu_custom_call.1} parent=11 // pred_fallthru
          _
      $region12: #{tpu_custom_call.1} parent=5 // pred_fallthru
        _
      %p114 = scmp.lt.s32.totalorder %s15, 2
      // Predicated region
      $region17: #{tpu_custom_call.1} parent=5 // pred_check
        %p115 = pneg %p114
      $region18: #{tpu_custom_call.1} parent=5 // pred_check_branch
        %117 = sbr.rel (%p115) target = $region20
      $region19: #{tpu_custom_call.1} parent=5 // pred_region
        // Predicated region
        $region21: #{tpu_custom_call.1} parent=19 // pred_check
          %p118 = pneg %p35
        $region22: #{tpu_custom_call.1} parent=19 // pred_check_branch
          %120 = sbr.rel (%p118) target = $region24
        $region23: #{tpu_custom_call.1} parent=19 // pred_region
          %s121 = sand.u32 %s25, 1
          %s122 = scalar_lea.sflag [#allocation3], %s121
          %s123 = sand.u32 %s25, 1
          %s124 = smul.addr %s123, 48
          %s125 = scalar_lea.vmem [#allocation2], %s124
          %s126 = smul.u32 2, %s15
          %s128 = ssub.s32 768, 768
          %129 = vsyncadd %s122, %s128
          %s130 = smul.addr %s126, 64
          %s131 = scalar_lea.hbm %s0, %s130
          %s132 = sshll.u32 %s125, 4
          %s133 = int_to_ptr.vmem [resolvable:$true] %s132
          %138 = dma.hbm_to_vmem [thread:$0]  %s131, 768, %s133, %s122, 256, 128, 8
        $region24: #{tpu_custom_call.1} parent=19 // pred_fallthru
          _
      $region20: #{tpu_custom_call.1} parent=5 // pred_fallthru
        _
      %p139 = scmp.le.s32.totalorder 1, %s15
      %p140 = scmp.lt.s32.totalorder %s15, 3
      %p141 = pnand %p139, %p140
      %p142 = pneg %p141
      // Predicated region
      $region25: #{tpu_custom_call.1} parent=5 // pred_check
        _
      $region26: #{tpu_custom_call.1} parent=5 // pred_check_branch
        %144 = sbr.rel (%p141) target = $region28
      $region27: #{tpu_custom_call.1} parent=5 // pred_region
        %s145 = ssub.s32 %s15, 1
        %s146 = sand.u32 %s28, 1
        %s147 = scalar_lea.sflag [#allocation3], %s146
        %s148 = sand.u32 %s28, 1
        %s149 = smul.addr %s148, 48
        %s150 = scalar_lea.vmem [#allocation2], %s149
        // Predicated region
        $region29: #{tpu_custom_call.1} parent=27 // pred_check
          %p151 = pneg %p41
        $region30: #{tpu_custom_call.1} parent=27 // pred_check_branch
          %153 = sbr.rel (%p151) target = $region32
        $region31: #{tpu_custom_call.1} parent=27 // pred_region
          %154 = dma.done %s147, 768
        $region32: #{tpu_custom_call.1} parent=27 // pred_fallthru
          _
        // Predicated region
        $region33: #{tpu_custom_call.1} parent=27 // pred_check
          %p155 = pneg %p62
        $region34: #{tpu_custom_call.1} parent=27 // pred_check_branch
          %157 = sbr.rel (%p155) target = $region36
        $region35: #{tpu_custom_call.1} parent=27 // pred_region
          %158 = dma.done [#allocation6], 64
        $region36: #{tpu_custom_call.1} parent=27 // pred_fallthru
          _
        %s159 = sand.u32 %s28, 1
        %s160 = scalar_lea.sflag [#allocation3], %s159
        %s161 = sand.u32 %s28, 1
        %s162 = smul.addr %s161, 48
        %s163 = scalar_lea.vmem [#allocation2], %s162
        %p164 = pneg %p41
        %p165 = pneg %p38
        %p166 = pneg %p62
        %p167 = pneg %p59
        %p168 = pneg %p88
        %p169 = pneg %p85
        %s170 = sand.u32 %s75, 1
        %s171 = scalar_lea.sflag [#allocation4], %s170
        %s172 = sand.u32 %s75, 1
        %s173 = smul.addr %s172, 16
        %s174 = scalar_lea.vmem [#allocation7], %s173
        %s175 = smul.u32 2, %s20
        %s176 = smul.u32 2, %s20
        %v178 = vld [vmem:[#allocation5] sm:$0xf]
        %v179 = vld [vmem:[%s150] sm:$0xff]
        %v180 = vld [vmem:[%s150 + $0x8] sm:$0xff]
        %v181 = vld [vmem:[%s150 + $0x10] sm:$0xff]
        %v182 = vld [vmem:[%s150 + $0x18] sm:$0xff]
        %v183 = vld [vmem:[%s150 + $0x20] sm:$0xff]
        %v184 = vld [vmem:[%s150 + $0x28] sm:$0xff]
        %v191 = vunpack.c.l.b16 %v179
        %v192 = vunpack.c.h.b16 %v179
        %v193 = vunpack.c.l.b16 %v180
        %v194 = vunpack.c.h.b16 %v180
        %v195 = vunpack.c.l.b16 %v181
        %v196 = vunpack.c.h.b16 %v181
        %v197 = vunpack.c.l.b16 %v182
        %v198 = vunpack.c.h.b16 %v182
        %v199 = vunpack.c.l.b16 %v183
        %v200 = vunpack.c.h.b16 %v183
        %v201 = vunpack.c.l.b16 %v184
        %v202 = vunpack.c.h.b16 %v184
        %v203 = vpack.c.b16 %v193, %v191
        %v204 = vpack.c.b16 %v194, %v192
        %v205 = vpack.c.b16 %v197, %v195
        %v206 = vpack.c.b16 %v198, %v196
        %v207 = vpack.c.b16 %v201, %v199
        %v208 = vpack.c.b16 %v202, %v200
        %vm215 = vcmask 392192
        %v217 = vsel %vm215, %v178, 0
        %219 = vmatprep.subr.bf16.mxu0 %v204
        %220 = vmatpush1.bf16.msra.mxu0 %v203
        %221 = vmatprep.subr.bf16.mxu0 %v206
        %222 = vmatpush1.bf16.msra.mxu0 %v205
        %223 = vmatprep.subr.bf16.mxu0 %v208
        %224 = vmatpush1.bf16.msra.mxu0 %v207
        %225 = vmatprep.subr.bf16.mxu0 0
        %226 = vmatpush1.bf16.msra.mxu0 0
        %227 = vmatprep.subr.bf16.mxu0 0
        %228 = vmatpush1.bf16.msra.mxu0 0
        %229 = vmatprep.subr.bf16.mxu0 0
        %230 = vmatpush1.bf16.msra.mxu0 0
        %231 = vmatprep.subr.bf16.mxu0 0
        %232 = vmatpush1.bf16.msra.mxu0 0
        %233 = vmatprep.subr.bf16.mxu0 0
        %234 = vmatpush1.bf16.msra.mxu0 0
        %235 = vmatprep.subr.bf16.mxu0 0
        %236 = vmatpush1.bf16.msra.mxu0 0
        %237 = vmatprep.subr.bf16.mxu0 0
        %238 = vmatpush1.bf16.msra.mxu0 0
        %239 = vmatprep.subr.bf16.mxu0 0
        %240 = vmatpush1.bf16.msra.mxu0 0
        %241 = vmatprep.subr.bf16.mxu0 0
        %242 = vmatpush1.bf16.msra.mxu0 0
        %243 = vmatprep.subr.bf16.mxu0 0
        %244 = vmatpush1.bf16.msra.mxu0 0
        %245 = vmatprep.subr.bf16.mxu0 0
        %246 = vmatpush1.bf16.msra.mxu0 0
        %247 = vmatprep.subr.bf16.mxu0 0
        %248 = vmatpush1.bf16.msra.mxu0 0
        %249 = vmatprep.subr.bf16.mxu0 0
        %250 = vmatpush1.bf16.msra.mxu0 0
        %251 = vmatprep.mubr.bf16.mxu0 0
        %252 = vmatmul.mubr.bf16.gmra.mrb[0].mxu0 %v217
        %v253 = vpop.f32.mrb[0].mxu0
        %v254 = vadd.f32 0.0, %v253
        %v255 = vpop.f32.mrb[0].mxu0
        %v256 = vadd.f32 0.0, %v255
        %v257 = vpop.f32.mrb[0].mxu0
        %v258 = vpop.f32.mrb[0].mxu0
        %259 = vdwg.mxu0
        %260 = vst [vmem:[%s174] sm:$0xff] %v254
        %261 = vst [vmem:[%s174 + $0x8] sm:$0xff] %v256
        %s262 = sand.u32 %s75, 1
        %s263 = scalar_lea.sflag [#allocation4], %s262
        %s264 = sand.u32 %s75, 1
        %s265 = smul.addr %s264, 16
        %s266 = scalar_lea.vmem [#allocation7], %s265
        // Predicated region
        $region37: #{tpu_custom_call.1} parent=27 // pred_check
          %p267 = pneg %p85
        $region38: #{tpu_custom_call.1} parent=27 // pred_check_branch
          %269 = sbr.rel (%p267) target = $region40
        $region39: #{tpu_custom_call.1} parent=27 // pred_region
          %s270 = smul.u32 2, %s20
          %s272 = ssub.s32 256, 256
          %273 = vsyncadd %s263, %s272
          %s274 = smul.addr %s270, 128
          %s275 = scalar_lea.hbm %s2, %s274
          %s277 = sshll.u32 %s266, 4
          %s278 = int_to_ptr.vmem [resolvable:$true] %s277
          %280 = dma.vmem_to_hbm [thread:$0]  %s278, 256, %s275, %s263
        $region40: #{tpu_custom_call.1} parent=27 // pred_fallthru
          _
      $region28: #{tpu_custom_call.1} parent=5 // pred_fallthru
        _
      %p281 = scmp.le.s32.totalorder 2, %s15
      // Predicated region
      $region41: #{tpu_custom_call.1} parent=5 // pred_check
        %p282 = pneg %p281
      $region42: #{tpu_custom_call.1} parent=5 // pred_check_branch
        %284 = sbr.rel (%p282) target = $region44
      $region43: #{tpu_custom_call.1} parent=5 // pred_region
        %s285 = ssub.s32 %s15, 2
        // Predicated region
        $region45: #{tpu_custom_call.1} parent=43 // pred_check
          %p286 = pneg %p91
        $region46: #{tpu_custom_call.1} parent=43 // pred_check_branch
          %288 = sbr.rel (%p286) target = $region48
        $region47: #{tpu_custom_call.1} parent=43 // pred_region
          %s289 = sand.u32 %s76, 1
          %s290 = scalar_lea.sflag [#allocation4], %s289
          %s291 = sand.u32 %s76, 1
          %s292 = smul.addr %s291, 16
          %s293 = scalar_lea.vmem [#allocation7], %s292
          %294 = dma.done %s290, 256
        $region48: #{tpu_custom_call.1} parent=43 // pred_fallthru
          _
      $region44: #{tpu_custom_call.1} parent=5 // pred_fallthru
        _
    $region6: #{tpu_custom_call.1} parent=1 // loop_footer
      %s19 = sadd.s32 1, %s15
    $region7: #{tpu_custom_call.1} parent=1 // loop_footer_branch
      %14 = sbr.rel target = $region3
    $region8: #{tpu_custom_call.1} parent=1 // loop_exit
      _
    %295 = vsyncpa [#allocation3], 1
    %s296 = scalar_lea.sflag [#allocation3], 1
    %297 = vsyncpa %s296, 1
    %298 = vsyncpa [#allocation6], 1
    %299 = vsyncpa [#allocation4], 1
    %s300 = scalar_lea.sflag [#allocation4], 1
    %301 = vsyncpa %s300, 1

</llo_original>
